<compile_context>
chip_gen: v7x
topology: tpu7x:2x2x1
jax: 0.10.0
libtpu: 0.0.40
codegen_flags: <defaults>
</compile_context>

<pallas_src>
import functools

import jax
import jax.numpy as jnp
from jax import lax
from jax.experimental import pallas as pl
from jax.experimental.pallas import tpu as pltpu

_EPS = 1e-8
_CLAMP = 1e-7

# Abramowitz & Stegun 4.4.46: arccos(x) ~ sqrt(1-x) * poly(x) on [0, 1], |error| <= 2e-8.
_ACOS_COEFFS = (
    1.5707963050, -0.2145988016, 0.0889789874, -0.0501743046,
    0.0308918810, -0.0170881256, 0.0066700901, -0.0012624911,
)


def _acos_poly(x):
    """arccos(x) for x in [-1, 1] using only sqrt/mul/add/select (Mosaic-friendly)."""
    ax = jnp.abs(x)
    poly = jnp.float32(_ACOS_COEFFS[-1])
    for c in _ACOS_COEFFS[-2::-1]:
        poly = poly * ax + jnp.float32(c)
    acos_abs = jnp.sqrt(jnp.maximum(1.0 - ax, 0.0)) * poly
    return jnp.where(x >= 0, acos_abs, jnp.float32(jnp.pi) - acos_abs)


def _combined_loss_kernel(pred_ref, tgt_ref, l1_ref, ang_ref, *,
                          num_ch, hw, tile_rows, needs_mask):
    """pred_ref/tgt_ref: (B, C, TILE_ROWS, 128) VMEM blocks (dense (8,128) channel slabs).
    l1_ref/ang_ref: (1, 8, 128) VMEM blocks holding this tile's partial sums (broadcast)."""
    # Single unrolled pass over channels (C is small/static): L1 partial + dot / squared norms.
    p0 = pred_ref[:, 0, :, :].astype(jnp.float32)        # (B, TILE_ROWS, 128)
    t0 = tgt_ref[:, 0, :, :].astype(jnp.float32)
    absdiff = jnp.abs(p0 - t0)
    dot = p0 * t0
    np2 = p0 * p0
    nt2 = t0 * t0
    for c in range(1, num_ch):
        pc = pred_ref[:, c, :, :].astype(jnp.float32)
        tc = tgt_ref[:, c, :, :].astype(jnp.float32)
        absdiff += jnp.abs(pc - tc)
        dot += pc * tc
        np2 += pc * pc
        nt2 += tc * tc

    # Per-pixel spectral angle (SAM), fully in-kernel. One fused sqrt, exact divide.
    cos = dot / (jnp.sqrt(np2 * nt2) + _EPS)
    cos = jnp.clip(cos, -1.0 + _CLAMP, 1.0 - _CLAMP)
    ang = _acos_poly(cos)                                 # (B, TILE_ROWS, 128)

    def _write(l1_part, ang_part):
        l1_ref[...] = jnp.zeros(l1_ref.shape, jnp.float32) + l1_part
        ang_ref[...] = jnp.zeros(ang_ref.shape, jnp.float32) + ang_part

    if not needs_mask:
        # No ragged tail anywhere: unmasked fast path on every tile.
        _write(jnp.sum(absdiff), jnp.sum(ang))
    else:
        i = pl.program_id(0)
        last = pl.num_programs(0) - 1

        @pl.when(i != last)
        def _():
            _write(jnp.sum(absdiff), jnp.sum(ang))

        @pl.when(i == last)
        def _():
            # Mask padded pixels (HW % 128 != 0) and the OOB rows of a partial last block.
            row = lax.broadcasted_iota(jnp.int32, ang.shape, 1)
            lane = lax.broadcasted_iota(jnp.int32, ang.shape, 2)
            flat = (i * tile_rows + row) * 128 + lane
            valid = flat < hw
            _write(jnp.sum(jnp.where(valid, absdiff, 0.0)),
                   jnp.sum(jnp.where(valid, ang, 0.0)))


def _round_up(x, m):
    return ((x + m - 1) // m) * m


def _cdiv(a, b):
    return -(-a // b)


def _vmem_capacity_bytes():
    """Physical VMEM capacity; conservative fallback (v7x = 64 MiB) if query unavailable."""
    try:
        info = pltpu.get_tpu_info()
        cap = getattr(info, "vmem_capacity_bytes", None)
        if cap:
            return int(cap)
    except Exception:
        pass
    return 64 * 1024 * 1024


def _pick_tile_rows(batch, channels, rows_total, itemsize):
    """Rows (of 128 lanes) per block: byte-sized (~2 MiB per input block), multiple of 8,
    capped so large images still produce >= 4 grid steps (keeps both v7x TCs busy)."""
    if rows_total <= 8:
        return rows_total                                  # full dim (allowed even if < 8)
    row_bytes = batch * channels * 128 * itemsize
    budget = 2 * 1024 * 1024                               # ~2 MiB per input block
    rows_budget = max(8, (budget // max(1, row_bytes)) // 8 * 8)
    rows_split = max(8, _round_up(_cdiv(rows_total, 4), 8))  # aim for >= 4 grid steps
    tile_rows = min(rows_budget, rows_split)
    if tile_rows >= rows_total:
        return rows_total
    return tile_rows


@functools.partial(jax.jit, static_argnames=("alpha", "beta"))
def combined_loss(pred, target, cluster_loss, alpha=0.1, beta=0.05):
    """pred, target: (B, C, H, W) arrays (NCHW, like the PyTorch module).
    Inputs may be float32 or bfloat16; accumulation is float32 inside the kernel."""
    B, C, H, W = pred.shape
    HW = H * W
    itemsize = jnp.dtype(pred.dtype).itemsize

    hw128 = _round_up(HW, 128)
    rows_total = hw128 // 128
    tile_rows = _pick_tile_rows(B, C, rows_total, itemsize)
    nt = _cdiv(rows_total, tile_rows)
    needs_mask = (hw128 != HW) or (rows_total % tile_rows != 0)

    p = pred.reshape(B, C, HW)
    t = target.reshape(B, C, HW)
    if hw128 != HW:
        # Minimal pad to a multiple of 128 so the free row-major 4-D reshape below is valid;
        # only hit for ragged spatial sizes (rare for image data). Padded pixels are masked.
        pad = ((0, 0), (0, 0), (0, hw128 - HW))
        p = jnp.pad(p, pad)
        t = jnp.pad(t, pad)
    p = p.reshape(B, C, rows_total, 128)
    t = t.reshape(B, C, rows_total, 128)

    kernel = functools.partial(_combined_loss_kernel, num_ch=C, hw=HW,
                               tile_rows=tile_rows, needs_mask=needs_mask)

    # VMEM budget: 2 inputs x 2 pipeline buffers x block + ~8 block-sized f32 temporaries
    # (absdiff/dot/np2/nt2/cos/ang/poly/mask) + tiny partial-sum output blocks.
    block_in_bytes = B * C * tile_rows * 128 * itemsize
    temp_bytes = 8 * B * tile_rows * 128 * 4
    vmem_est = 2 * 2 * block_in_bytes + temp_bytes + 2 * 2 * (8 * 128 * 4)
    hard_cap = min(3 * _vmem_capacity_bytes() // 4, 96 * 1024 * 1024)  # 48 MiB on v7x
    vmem_limit = int(min(hard_cap, max(2 * vmem_est, 32 * 1024 * 1024)))

    l1_parts, ang_parts = pl.pallas_call(
        kernel,
        grid=(nt,),
        in_specs=[
            pl.BlockSpec((B, C, tile_rows, 128), lambda i: (0, 0, i, 0)),
            pl.BlockSpec((B, C, tile_rows, 128), lambda i: (0, 0, i, 0)),
        ],
        out_specs=(
            pl.BlockSpec((1, 8, 128), lambda i: (i, 0, 0)),
            pl.BlockSpec((1, 8, 128), lambda i: (i, 0, 0)),
        ),
        out_shape=(
            jax.ShapeDtypeStruct((nt, 8, 128), jnp.float32),  # per-tile L1 partial sums
            jax.ShapeDtypeStruct((nt, 8, 128), jnp.float32),  # per-tile SAM-angle partial sums
        ),
        compiler_params=pltpu.CompilerParams(
            dimension_semantics=("parallel",),   # shards pixel tiles across v7x's 2 TCs
            vmem_limit_bytes=vmem_limit,
        ),
    )(p, t)

    l1_sum = jnp.sum(l1_parts[:, 0, 0])
    ang_sum = jnp.sum(ang_parts[:, 0, 0])

    recon_loss = l1_sum / jnp.float32(B * C * H * W)
    decouple_loss = ang_sum / jnp.float32(B * H * W)
    cluster_loss = jnp.asarray(cluster_loss, jnp.float32)

    total_loss = recon_loss + alpha * cluster_loss + beta * decouple_loss
    return total_loss, {
        "total_loss": total_loss,
        "recon_loss": recon_loss,
        "cluster_loss": cluster_loss,
        "decouple_loss": decouple_loss,
    }


def _reference(pred, target, cluster_loss, alpha, beta):
    recon = jnp.mean(jnp.abs(pred - target))
    dot = jnp.sum(pred * target, axis=1)
    n = jnp.linalg.norm(pred, axis=1) * jnp.linalg.norm(target, axis=1)
    cos = jnp.clip(dot / (n + _EPS), -1.0 + _CLAMP, 1.0 - _CLAMP)
    sam = jnp.mean(jnp.arccos(cos))
    total = recon + alpha * cluster_loss + beta * sam
    return total, recon, sam


if __name__ == "__main__":
    key = jax.random.PRNGKey(0)
    k1, k2, k3 = jax.random.split(key, 3)

    B, C, H, W = 2, 4, 16, 16
    pred = jax.random.uniform(k1, (B, C, H, W), dtype=jnp.float32)
    target = jax.random.uniform(k2, (B, C, H, W), dtype=jnp.float32)
    # model_outputs['cluster_loss'] equivalent: scalar produced elsewhere in the model.
    cluster_loss = jax.random.uniform(k3, (), dtype=jnp.float32)

    total, parts = combined_loss(pred, target, cluster_loss, alpha=0.1, beta=0.05)
    total = jax.block_until_ready(total)
    parts = jax.block_until_ready(parts)

    ref_total, ref_recon, ref_sam = _reference(pred, target, cluster_loss, 0.1, 0.05)
    assert jnp.allclose(total, ref_total, rtol=1e-5, atol=1e-5), (total, ref_total)
    assert jnp.allclose(parts["recon_loss"], ref_recon, rtol=1e-5, atol=1e-5)
    assert jnp.allclose(parts["decouple_loss"], ref_sam, rtol=1e-5, atol=1e-5)

    # Multi-tile path (several grid steps, unmasked interior tiles).
    Hm, Wm = 128, 128
    pred_m = jax.random.uniform(k1, (B, C, Hm, Wm), dtype=jnp.float32)
    target_m = jax.random.uniform(k2, (B, C, Hm, Wm), dtype=jnp.float32)
    total_m, _ = combined_loss(pred_m, target_m, cluster_loss, alpha=0.1, beta=0.05)
    total_m = jax.block_until_ready(total_m)
    ref_total_m, _, _ = _reference(pred_m, target_m, cluster_loss, 0.1, 0.05)
    assert jnp.allclose(total_m, ref_total_m, rtol=1e-5, atol=1e-5), (total_m, ref_total_m)

    # Ragged spatial size (HW not a multiple of 128) exercises the masked-tail path.
    Hr, Wr = 9, 13
    pred_r = jax.random.uniform(k1, (B, C, Hr, Wr), dtype=jnp.float32)
    target_r = jax.random.uniform(k2, (B, C, Hr, Wr), dtype=jnp.float32)
    total_r, _ = combined_loss(pred_r, target_r, cluster_loss, alpha=0.1, beta=0.05)
    total_r = jax.block_until_ready(total_r)
    ref_total_r, _, _ = _reference(pred_r, target_r, cluster_loss, 0.1, 0.05)
    assert jnp.allclose(total_r, ref_total_r, rtol=1e-5, atol=1e-5), (total_r, ref_total_r)

    print("KERNEL_OK")
</pallas_src>

<mosaic_0001>
module attributes {stable_mosaic.version = 11 : i64} {
  func.func @_combined_loss_kernel(%arg0: i32, %arg1: memref<2x4x2x128xf32, #tpu.memory_space<vmem>>, %arg2: memref<2x4x2x128xf32, #tpu.memory_space<vmem>>, %arg3: memref<1x8x128xf32, #tpu.memory_space<vmem>>, %arg4: memref<1x8x128xf32, #tpu.memory_space<vmem>>) attributes {dimension_semantics = [#tpu.dimension_semantics<parallel>], iteration_bounds = array<i64: 1>, scalar_prefetch = 0 : i64, scratch_operands = 0 : i64, tpu.core_type = #tpu.core_type<tc>, window_params = [{transform_indices = @transform_0, window_bounds = array<i64: 2, 4, 2, 128>}, {transform_indices = @transform_1, window_bounds = array<i64: 2, 4, 2, 128>}, {transform_indices = @transform_2, window_bounds = array<i64: 1, 8, 128>}, {transform_indices = @transform_3, window_bounds = array<i64: 1, 8, 128>}]} {
    %c0 = arith.constant 0 : index
    %c0_0 = arith.constant 0 : index
    %c0_1 = arith.constant 0 : index
    %c0_2 = arith.constant 0 : index
    %0 = vector.load %arg1[%c0, %c0_0, %c0_1, %c0_2] : memref<2x4x2x128xf32, #tpu.memory_space<vmem>>, vector<2x1x2x128xf32>
    %1 = vector.shape_cast %0 : vector<2x1x2x128xf32> to vector<2x2x128xf32>
    %c0_3 = arith.constant 0 : index
    %c0_4 = arith.constant 0 : index
    %c0_5 = arith.constant 0 : index
    %c0_6 = arith.constant 0 : index
    %2 = vector.load %arg2[%c0_3, %c0_4, %c0_5, %c0_6] : memref<2x4x2x128xf32, #tpu.memory_space<vmem>>, vector<2x1x2x128xf32>
    %3 = vector.shape_cast %2 : vector<2x1x2x128xf32> to vector<2x2x128xf32>
    %4 = arith.subf %1, %3 : vector<2x2x128xf32>
    %5 = math.absf %4 : vector<2x2x128xf32>
    %6 = arith.mulf %1, %3 : vector<2x2x128xf32>
    %7 = arith.mulf %1, %1 : vector<2x2x128xf32>
    %8 = arith.mulf %3, %3 : vector<2x2x128xf32>
    %c0_7 = arith.constant 0 : index
    %c1 = arith.constant 1 : index
    %c0_8 = arith.constant 0 : index
    %c0_9 = arith.constant 0 : index
    %9 = vector.load %arg1[%c0_7, %c1, %c0_8, %c0_9] : memref<2x4x2x128xf32, #tpu.memory_space<vmem>>, vector<2x1x2x128xf32>
    %10 = vector.shape_cast %9 : vector<2x1x2x128xf32> to vector<2x2x128xf32>
    %c0_10 = arith.constant 0 : index
    %c1_11 = arith.constant 1 : index
    %c0_12 = arith.constant 0 : index
    %c0_13 = arith.constant 0 : index
    %11 = vector.load %arg2[%c0_10, %c1_11, %c0_12, %c0_13] : memref<2x4x2x128xf32, #tpu.memory_space<vmem>>, vector<2x1x2x128xf32>
    %12 = vector.shape_cast %11 : vector<2x1x2x128xf32> to vector<2x2x128xf32>
    %13 = arith.subf %10, %12 : vector<2x2x128xf32>
    %14 = math.absf %13 : vector<2x2x128xf32>
    %15 = arith.addf %5, %14 : vector<2x2x128xf32>
    %16 = arith.mulf %10, %12 : vector<2x2x128xf32>
    %17 = arith.addf %6, %16 : vector<2x2x128xf32>
    %18 = arith.mulf %10, %10 : vector<2x2x128xf32>
    %19 = arith.addf %7, %18 : vector<2x2x128xf32>
    %20 = arith.mulf %12, %12 : vector<2x2x128xf32>
    %21 = arith.addf %8, %20 : vector<2x2x128xf32>
    %c0_14 = arith.constant 0 : index
    %c2 = arith.constant 2 : index
    %c0_15 = arith.constant 0 : index
    %c0_16 = arith.constant 0 : index
    %22 = vector.load %arg1[%c0_14, %c2, %c0_15, %c0_16] : memref<2x4x2x128xf32, #tpu.memory_space<vmem>>, vector<2x1x2x128xf32>
    %23 = vector.shape_cast %22 : vector<2x1x2x128xf32> to vector<2x2x128xf32>
    %c0_17 = arith.constant 0 : index
    %c2_18 = arith.constant 2 : index
    %c0_19 = arith.constant 0 : index
    %c0_20 = arith.constant 0 : index
    %24 = vector.load %arg2[%c0_17, %c2_18, %c0_19, %c0_20] : memref<2x4x2x128xf32, #tpu.memory_space<vmem>>, vector<2x1x2x128xf32>
    %25 = vector.shape_cast %24 : vector<2x1x2x128xf32> to vector<2x2x128xf32>
    %26 = arith.subf %23, %25 : vector<2x2x128xf32>
    %27 = math.absf %26 : vector<2x2x128xf32>
    %28 = arith.addf %15, %27 : vector<2x2x128xf32>
    %29 = arith.mulf %23, %25 : vector<2x2x128xf32>
    %30 = arith.addf %17, %29 : vector<2x2x128xf32>
    %31 = arith.mulf %23, %23 : vector<2x2x128xf32>
    %32 = arith.addf %19, %31 : vector<2x2x128xf32>
    %33 = arith.mulf %25, %25 : vector<2x2x128xf32>
    %34 = arith.addf %21, %33 : vector<2x2x128xf32>
    %c0_21 = arith.constant 0 : index
    %c3 = arith.constant 3 : index
    %c0_22 = arith.constant 0 : index
    %c0_23 = arith.constant 0 : index
    %35 = vector.load %arg1[%c0_21, %c3, %c0_22, %c0_23] : memref<2x4x2x128xf32, #tpu.memory_space<vmem>>, vector<2x1x2x128xf32>
    %36 = vector.shape_cast %35 : vector<2x1x2x128xf32> to vector<2x2x128xf32>
    %c0_24 = arith.constant 0 : index
    %c3_25 = arith.constant 3 : index
    %c0_26 = arith.constant 0 : index
    %c0_27 = arith.constant 0 : index
    %37 = vector.load %arg2[%c0_24, %c3_25, %c0_26, %c0_27] : memref<2x4x2x128xf32, #tpu.memory_space<vmem>>, vector<2x1x2x128xf32>
    %38 = vector.shape_cast %37 : vector<2x1x2x128xf32> to vector<2x2x128xf32>
    %39 = arith.subf %36, %38 : vector<2x2x128xf32>
    %40 = math.absf %39 : vector<2x2x128xf32>
    %41 = arith.addf %28, %40 : vector<2x2x128xf32>
    %42 = arith.mulf %36, %38 : vector<2x2x128xf32>
    %43 = arith.addf %30, %42 : vector<2x2x128xf32>
    %44 = arith.mulf %36, %36 : vector<2x2x128xf32>
    %45 = arith.addf %32, %44 : vector<2x2x128xf32>
    %46 = arith.mulf %38, %38 : vector<2x2x128xf32>
    %47 = arith.addf %34, %46 : vector<2x2x128xf32>
    %48 = arith.mulf %45, %47 : vector<2x2x128xf32>
    %49 = math.sqrt %48 : vector<2x2x128xf32>
    %cst = arith.constant 9.99999993E-9 : f32
    %50 = vector.broadcast %cst : f32 to vector<2x2x128xf32>
    %51 = arith.addf %49, %50 : vector<2x2x128xf32>
    %52 = arith.divf %43, %51 : vector<2x2x128xf32>
    %cst_28 = arith.constant -0.99999988 : f32
    %cst_29 = arith.constant 0.99999988 : f32
    %53 = vector.broadcast %cst_28 : f32 to vector<2x2x128xf32>
    %54 = arith.maximumf %53, %52 : vector<2x2x128xf32>
    %55 = vector.broadcast %cst_29 : f32 to vector<2x2x128xf32>
    %56 = arith.minimumf %55, %54 : vector<2x2x128xf32>
    %57 = math.absf %56 : vector<2x2x128xf32>
    %cst_30 = arith.constant -0.0012624911 : f32
    %58 = vector.broadcast %cst_30 : f32 to vector<2x2x128xf32>
    %59 = arith.mulf %58, %57 : vector<2x2x128xf32>
    %cst_31 = arith.constant 6.670090e-03 : f32
    %60 = vector.broadcast %cst_31 : f32 to vector<2x2x128xf32>
    %61 = arith.addf %59, %60 : vector<2x2x128xf32>
    %62 = arith.mulf %61, %57 : vector<2x2x128xf32>
    %cst_32 = arith.constant -0.0170881264 : f32
    %63 = vector.broadcast %cst_32 : f32 to vector<2x2x128xf32>
    %64 = arith.addf %62, %63 : vector<2x2x128xf32>
    %65 = arith.mulf %64, %57 : vector<2x2x128xf32>
    %cst_33 = arith.constant 0.0308918804 : f32
    %66 = vector.broadcast %cst_33 : f32 to vector<2x2x128xf32>
    %67 = arith.addf %65, %66 : vector<2x2x128xf32>
    %68 = arith.mulf %67, %57 : vector<2x2x128xf32>
    %cst_34 = arith.constant -0.0501743034 : f32
    %69 = vector.broadcast %cst_34 : f32 to vector<2x2x128xf32>
    %70 = arith.addf %68, %69 : vector<2x2x128xf32>
    %71 = arith.mulf %70, %57 : vector<2x2x128xf32>
    %cst_35 = arith.constant 0.0889789909 : f32
    %72 = vector.broadcast %cst_35 : f32 to vector<2x2x128xf32>
    %73 = arith.addf %71, %72 : vector<2x2x128xf32>
    %74 = arith.mulf %73, %57 : vector<2x2x128xf32>
    %cst_36 = arith.constant -0.214598805 : f32
    %75 = vector.broadcast %cst_36 : f32 to vector<2x2x128xf32>
    %76 = arith.addf %74, %75 : vector<2x2x128xf32>
    %77 = arith.mulf %76, %57 : vector<2x2x128xf32>
    %cst_37 = arith.constant 1.57079625 : f32
    %78 = vector.broadcast %cst_37 : f32 to vector<2x2x128xf32>
    %79 = arith.addf %77, %78 : vector<2x2x128xf32>
    %cst_38 = arith.constant 1.000000e+00 : f32
    %80 = vector.broadcast %cst_38 : f32 to vector<2x2x128xf32>
    %81 = arith.subf %80, %57 : vector<2x2x128xf32>
    %cst_39 = arith.constant 0.000000e+00 : f32
    %82 = vector.broadcast %cst_39 : f32 to vector<2x2x128xf32>
    %83 = arith.maximumf %81, %82 : vector<2x2x128xf32>
    %84 = math.sqrt %83 : vector<2x2x128xf32>
    %85 = arith.mulf %84, %79 : vector<2x2x128xf32>
    %cst_40 = arith.constant 0.000000e+00 : f32
    %86 = vector.broadcast %cst_40 : f32 to vector<2x2x128xf32>
    %87 = arith.cmpf oge, %56, %86 : vector<2x2x128xf32>
    %cst_41 = arith.constant 3.14159274 : f32
    %88 = vector.broadcast %cst_41 : f32 to vector<2x2x128xf32>
    %89 = arith.subf %88, %85 : vector<2x2x128xf32>
    %90 = arith.select %87, %85, %89 : vector<2x2x128xi1>, vector<2x2x128xf32>
    %91 = vector.shape_cast %41 : vector<2x2x128xf32> to vector<1x2x2x128xf32>
    %cst_42 = arith.constant dense<0.000000e+00> : vector<1xf32>
    %92 = vector.multi_reduction <add>, %91, %cst_42 [1, 2, 3] : vector<1x2x2x128xf32> to vector<1xf32>
    %93 = vector.shape_cast %92 : vector<1xf32> to vector<1x1x1x1xf32>
    %94 = vector.extract %93[0, 0, 0, 0] : f32 from vector<1x1x1x1xf32>
    %95 = vector.shape_cast %90 : vector<2x2x128xf32> to vector<1x2x2x128xf32>
    %cst_43 = arith.constant dense<0.000000e+00> : vector<1xf32>
    %96 = vector.multi_reduction <add>, %95, %cst_43 [1, 2, 3] : vector<1x2x2x128xf32> to vector<1xf32>
    %97 = vector.shape_cast %96 : vector<1xf32> to vector<1x1x1x1xf32>
    %98 = vector.extract %97[0, 0, 0, 0] : f32 from vector<1x1x1x1xf32>
    %cst_44 = arith.constant 0.000000e+00 : f32
    %99 = vector.broadcast %cst_44 : f32 to vector<1x8x128xf32>
    %100 = vector.broadcast %94 : f32 to vector<1x8x128xf32>
    %101 = arith.addf %99, %100 : vector<1x8x128xf32>
    %c0_45 = arith.constant 0 : index
    %c0_46 = arith.constant 0 : index
    %c0_47 = arith.constant 0 : index
    %102 = vector.load %arg3[%c0_45, %c0_46, %c0_47] : memref<1x8x128xf32, #tpu.memory_space<vmem>>, vector<1x8x128xf32>
    tpu.vector_store %arg3[%c0_45, %c0_46, %c0_47], %101 {strides = array<i32>} : memref<1x8x128xf32, #tpu.memory_space<vmem>>, vector<1x8x128xf32>,
    %cst_48 = arith.constant 0.000000e+00 : f32
    %103 = vector.broadcast %cst_48 : f32 to vector<1x8x128xf32>
    %104 = vector.broadcast %98 : f32 to vector<1x8x128xf32>
    %105 = arith.addf %103, %104 : vector<1x8x128xf32>
    %c0_49 = arith.constant 0 : index
    %c0_50 = arith.constant 0 : index
    %c0_51 = arith.constant 0 : index
    %106 = vector.load %arg4[%c0_49, %c0_50, %c0_51] : memref<1x8x128xf32, #tpu.memory_space<vmem>>, vector<1x8x128xf32>
    tpu.vector_store %arg4[%c0_49, %c0_50, %c0_51], %105 {strides = array<i32>} : memref<1x8x128xf32, #tpu.memory_space<vmem>>, vector<1x8x128xf32>,
    return
  }
  func.func @transform_0(%arg0: i32) -> (i32, i32, i32, i32) {
    %c0_i32 = arith.constant 0 : i32
    %c0_i32_0 = arith.constant 0 : i32
    %c0_i32_1 = arith.constant 0 : i32
    %c0_i32_2 = arith.constant 0 : i32
    return %c0_i32, %c0_i32_0, %arg0, %c0_i32_1 : i32, i32, i32, i32
  }
  func.func @transform_1(%arg0: i32) -> (i32, i32, i32, i32) {
    %c0_i32 = arith.constant 0 : i32
    %c0_i32_0 = arith.constant 0 : i32
    %c0_i32_1 = arith.constant 0 : i32
    %c0_i32_2 = arith.constant 0 : i32
    return %c0_i32, %c0_i32_0, %arg0, %c0_i32_1 : i32, i32, i32, i32
  }
  func.func @transform_2(%arg0: i32) -> (i32, i32, i32) {
    %c0_i32 = arith.constant 0 : i32
    %c0_i32_0 = arith.constant 0 : i32
    %c0_i32_1 = arith.constant 0 : i32
    return %arg0, %c0_i32, %c0_i32_0 : i32, i32, i32
  }
  func.func @transform_3(%arg0: i32) -> (i32, i32, i32) {
    %c0_i32 = arith.constant 0 : i32
    %c0_i32_0 = arith.constant 0 : i32
    %c0_i32_1 = arith.constant 0 : i32
    return %arg0, %c0_i32, %c0_i32_0 : i32, i32, i32
  }
}

</mosaic_0001>

<llo_original>
// kernel: combined_loss.1
$region0: #{combined_loss.1}
  #allocation0 [shape = 'u32[]', space=smem, size = 0x4, offset = 0x4, fixed_abs, tag = 'smem constant byte address 0x4 - core index']
  #allocation1 [shape = 'u32[144,128]{1,0:T(1,128)}', space=vmem, size = 0x12000, scoped, tag = 'internal scratch']
  %s0 = inlined_call_operand.vmem [shape: f32[2,4,2,128], index: 0, kind: input, shape index: {}]
  %s1 = inlined_call_operand.vmem [shape: f32[2,4,2,128], index: 1, kind: input, shape index: {}]
  %s2 = inlined_call_operand.vmem [shape: f32[1,8,128], index: 2, kind: output, shape index: {0}]
  %s3 = inlined_call_operand.vmem [shape: f32[1,8,128], index: 3, kind: output, shape index: {1}]
  %4 = xla_tuple %s2, %s3
  %s5 = sld [smem:[#allocation0]]
  $region26: #{combined_loss.1} parent=0
    _
  %s7 = ssub.s32 1, %s5
  %s8 = scalar_select 0, %s7, %s5
  // Predicated region
  $region2: #{combined_loss.1} parent=0 // pred_check
    _
  $region3: #{combined_loss.1} parent=0 // pred_check_branch
    %10 = sbr.rel (0) target = $region5
  $region4: #{combined_loss.1} parent=0 // pred_region
    _
  $region5: #{combined_loss.1} parent=0 // pred_fallthru
    _
  // Predicated region
  $region6: #{combined_loss.1} parent=0 // pred_check
    _
  $region7: #{combined_loss.1} parent=0 // pred_check_branch
    %12 = sbr.rel (0) target = $region9
  $region8: #{combined_loss.1} parent=0 // pred_region
    _
  $region9: #{combined_loss.1} parent=0 // pred_fallthru
    _
  %v13 = vld [vmem:[%s0] sm:$0x3]
  %v14 = vld [vmem:[%s0 + $0x8] sm:$0x3]
  %v15 = vld [vmem:[%s1] sm:$0x3]
  %v16 = vld [vmem:[%s1 + $0x8] sm:$0x3]
  %v17 = vsub.f32 %v13, %v15
  %v18 = vsub.f32 %v14, %v16
  %v19 = vand.u32 2147483647, %v17
  %v20 = vand.u32 2147483647, %v18
  %v21 = vmul.f32 %v13, %v15
  %v22 = vmul.f32 %v14, %v16
  %v23 = vmul.f32 %v13, %v13
  %v24 = vmul.f32 %v14, %v14
  %v25 = vmul.f32 %v15, %v15
  %v26 = vmul.f32 %v16, %v16
  %s27 = scalar_lea.vmem %s0, 2
  %v28 = vld [vmem:[%s27] sm:$0x3]
  %v29 = vld [vmem:[%s27 + $0x8] sm:$0x3]
  %s30 = scalar_lea.vmem %s1, 2
  %v31 = vld [vmem:[%s30] sm:$0x3]
  %v32 = vld [vmem:[%s30 + $0x8] sm:$0x3]
  %v33 = vsub.f32 %v28, %v31
  %v34 = vsub.f32 %v29, %v32
  %v35 = vand.u32 2147483647, %v33
  %v36 = vand.u32 2147483647, %v34
  %v37 = vadd.f32 %v19, %v35
  %v38 = vadd.f32 %v20, %v36
  %v39 = vmul.f32 %v28, %v31
  %v40 = vmul.f32 %v29, %v32
  %v41 = vadd.f32 %v21, %v39
  %v42 = vadd.f32 %v22, %v40
  %v43 = vmul.f32 %v28, %v28
  %v44 = vmul.f32 %v29, %v29
  %v45 = vadd.f32 %v23, %v43
  %v46 = vadd.f32 %v24, %v44
  %v47 = vmul.f32 %v31, %v31
  %v48 = vmul.f32 %v32, %v32
  %v49 = vadd.f32 %v25, %v47
  %v50 = vadd.f32 %v26, %v48
  %s51 = scalar_lea.vmem %s0, 4
  %v52 = vld [vmem:[%s51] sm:$0x3]
  %v53 = vld [vmem:[%s51 + $0x8] sm:$0x3]
  %s54 = scalar_lea.vmem %s1, 4
  %v55 = vld [vmem:[%s54] sm:$0x3]
  %v56 = vld [vmem:[%s54 + $0x8] sm:$0x3]
  %v57 = vsub.f32 %v52, %v55
  %v58 = vsub.f32 %v53, %v56
  %v59 = vand.u32 2147483647, %v57
  %v60 = vand.u32 2147483647, %v58
  %v61 = vadd.f32 %v37, %v59
  %v62 = vadd.f32 %v38, %v60
  %v63 = vmul.f32 %v52, %v55
  %v64 = vmul.f32 %v53, %v56
  %v65 = vadd.f32 %v41, %v63
  %v66 = vadd.f32 %v42, %v64
  %v67 = vmul.f32 %v52, %v52
  %v68 = vmul.f32 %v53, %v53
  %v69 = vadd.f32 %v45, %v67
  %v70 = vadd.f32 %v46, %v68
  %v71 = vmul.f32 %v55, %v55
  %v72 = vmul.f32 %v56, %v56
  %v73 = vadd.f32 %v49, %v71
  %v74 = vadd.f32 %v50, %v72
  %s75 = scalar_lea.vmem %s0, 6
  %v76 = vld [vmem:[%s75] sm:$0x3]
  %v77 = vld [vmem:[%s75 + $0x8] sm:$0x3]
  %s78 = scalar_lea.vmem %s1, 6
  %v79 = vld [vmem:[%s78] sm:$0x3]
  %v80 = vld [vmem:[%s78 + $0x8] sm:$0x3]
  %v81 = vsub.f32 %v76, %v79
  %v82 = vsub.f32 %v77, %v80
  %v83 = vand.u32 2147483647, %v81
  %v84 = vand.u32 2147483647, %v82
  %v85 = vadd.f32 %v61, %v83
  %v86 = vadd.f32 %v62, %v84
  %v87 = vmul.f32 %v76, %v79
  %v88 = vmul.f32 %v77, %v80
  %v89 = vadd.f32 %v65, %v87
  %v90 = vadd.f32 %v66, %v88
  %v91 = vmul.f32 %v76, %v76
  %v92 = vmul.f32 %v77, %v77
  %v93 = vadd.f32 %v69, %v91
  %v94 = vadd.f32 %v70, %v92
  %v95 = vmul.f32 %v79, %v79
  %v96 = vmul.f32 %v80, %v80
  %v97 = vadd.f32 %v73, %v95
  %v98 = vadd.f32 %v74, %v96
  %v99 = vmul.f32 %v93, %v97
  %v100 = vmul.f32 %v94, %v98
  %v101 = vrsqrt.pop %v99
  %v102 = vmul.f32 %v99, %v101
  %vm103 = vcmp.eq.f32.partialorder %v99, inf
  %v104 = vsel %vm103, %v99, %v102
  %vm105 = vcmp.eq.f32.partialorder %v99, 0.0
  %v106 = vand.u32 %v99, 2147483648
  %v107 = vsel %vm105, %v106, %v104
  %v108 = vrsqrt.pop %v100
  %v109 = vmul.f32 %v100, %v108
  %vm110 = vcmp.eq.f32.partialorder %v100, inf
  %v111 = vsel %vm110, %v100, %v109
  %vm112 = vcmp.eq.f32.partialorder %v100, 0.0
  %v113 = vand.u32 %v100, 2147483648
  %v114 = vsel %vm112, %v113, %v111
  %v115 = vadd.f32 %v107, 1e-08
  %v116 = vadd.f32 %v114, 1e-08
  %v117 = vrcp.pop %v115
  %v118 = vmul.f32 %v89, %v117
  %v119 = vrcp.pop %v116
  %v120 = vmul.f32 %v90, %v119
  %v121 = vmax.f32 %v118, -0.9999999
  %v122 = vmax.f32 %v120, -0.9999999
  %v123 = vmin.f32 %v121, 0.9999999
  %v124 = vmin.f32 %v122, 0.9999999
  %v125 = vand.u32 2147483647, %v123
  %v126 = vand.u32 2147483647, %v124
  %v127 = vmul.f32 %v125, -0.0012624911
  %v128 = vmul.f32 %v126, -0.0012624911
  %v129 = vadd.f32 %v127, 0.00667009
  %v130 = vadd.f32 %v128, 0.00667009
  %v131 = vmul.f32 %v129, %v125
  %v132 = vmul.f32 %v130, %v126
  %v133 = vadd.f32 %v131, -0.017088126
  %v134 = vadd.f32 %v132, -0.017088126
  %v135 = vmul.f32 %v133, %v125
  %v136 = vmul.f32 %v134, %v126
  %v137 = vadd.f32 %v135, 0.03089188
  %v138 = vadd.f32 %v136, 0.03089188
  %v139 = vmul.f32 %v137, %v125
  %v140 = vmul.f32 %v138, %v126
  %v141 = vadd.f32 %v139, -0.050174303
  %v142 = vadd.f32 %v140, -0.050174303
  %v143 = vmul.f32 %v141, %v125
  %v144 = vmul.f32 %v142, %v126
  %v145 = vadd.f32 %v143, 0.08897899
  %v146 = vadd.f32 %v144, 0.08897899
  %v147 = vmul.f32 %v145, %v125
  %v148 = vmul.f32 %v146, %v126
  %v149 = vadd.f32 %v147, -0.2145988
  %v150 = vadd.f32 %v148, -0.2145988
  %v151 = vmul.f32 %v149, %v125
  %v152 = vmul.f32 %v150, %v126
  %v153 = vadd.f32 %v151, 1.5707963
  %v154 = vadd.f32 %v152, 1.5707963
  %v155 = vsub.f32 1.0, %v125
  %v156 = vsub.f32 1.0, %v126
  %v157 = vmax.f32 %v155, 0.0
  %v158 = vmax.f32 %v156, 0.0
  %v159 = vrsqrt.pop %v157
  %v160 = vmul.f32 %v157, %v159
  %vm161 = vcmp.eq.f32.partialorder %v157, inf
  %v162 = vsel %vm161, %v157, %v160
  %vm163 = vcmp.eq.f32.partialorder %v157, 0.0
  %v164 = vand.u32 %v157, 2147483648
  %v165 = vsel %vm163, %v164, %v162
  %v166 = vrsqrt.pop %v158
  %v167 = vmul.f32 %v158, %v166
  %vm168 = vcmp.eq.f32.partialorder %v158, inf
  %v169 = vsel %vm168, %v158, %v167
  %vm170 = vcmp.eq.f32.partialorder %v158, 0.0
  %v171 = vand.u32 %v158, 2147483648
  %v172 = vsel %vm170, %v171, %v169
  %v173 = vmul.f32 %v165, %v153
  %v174 = vmul.f32 %v172, %v154
  %vm175 = vcmp.ge.f32.partialorder %v123, 0.0
  %vm176 = vcmp.ge.f32.partialorder %v124, 0.0
  %v177 = vsub.f32 3.1415927, %v173
  %v178 = vsub.f32 3.1415927, %v174
  %v179 = vsel %vm175, %v173, %v177
  %v180 = vsel %vm176, %v174, %v178
  %vm181 = vcmask 1041408
  %v182 = vsel %vm181, %v85, 0.0
  %v183 = vsel %vm181, %v86, 0.0
  %v184 = vadd.f32 %v182, %v183
  %185 = vadd.xlane.f32.xlu0 %v184
  %v186 = vpop.xlane.xlu0 %185
  %v187 = vrot.slane %v186, 4
  %v188 = vadd.f32 %v186, %v187
  %v189 = vrot.slane %v188, 2
  %v190 = vadd.f32 %v188, %v189
  %v191 = vrot.slane %v190, 1
  %v192 = vadd.f32 %v190, %v191
  %s193 = vtos %v192
  %v194 = vsel %vm181, %v179, 0.0
  %v195 = vsel %vm181, %v180, 0.0
  %v196 = vadd.f32 %v194, %v195
  %197 = vadd.xlane.f32.xlu0 %v196
  %v198 = vpop.xlane.xlu0 %197
  %v199 = vrot.slane %v198, 4
  %v200 = vadd.f32 %v198, %v199
  %v201 = vrot.slane %v200, 2
  %v202 = vadd.f32 %v200, %v201
  %v203 = vrot.slane %v202, 1
  %v204 = vadd.f32 %v202, %v203
  %s205 = vtos %v204
  %v206 = vstv %s193
  %v207 = vadd.f32 %v206, 0.0
  %208 = vst [vmem:[%s2] sm:$0xff] %v207
  %v209 = vstv %s205
  %v210 = vadd.f32 %v209, 0.0
  %211 = vst [vmem:[%s3] sm:$0xff] %v210
  // Predicated region
  $region10: #{combined_loss.1} parent=0 // pred_check
    _
  $region11: #{combined_loss.1} parent=0 // pred_check_branch
    %213 = sbr.rel (0) target = $region13
  $region12: #{combined_loss.1} parent=0 // pred_region
    _
  $region13: #{combined_loss.1} parent=0 // pred_fallthru
    _
  // Predicated region
  $region14: #{combined_loss.1} parent=0 // pred_check
    _
  $region15: #{combined_loss.1} parent=0 // pred_check_branch
    %215 = sbr.rel (0) target = $region17
  $region16: #{combined_loss.1} parent=0 // pred_region
    _
  $region17: #{combined_loss.1} parent=0 // pred_fallthru
    _
  // Predicated region
  $region18: #{combined_loss.1} parent=0 // pred_check
    _
  $region19: #{combined_loss.1} parent=0 // pred_check_branch
    %217 = sbr.rel (0) target = $region21
  $region20: #{combined_loss.1} parent=0 // pred_region
    _
  $region21: #{combined_loss.1} parent=0 // pred_fallthru
    _
  // Predicated region
  $region22: #{combined_loss.1} parent=0 // pred_check
    _
  $region23: #{combined_loss.1} parent=0 // pred_check_branch
    %219 = sbr.rel (0) target = $region25
  $region24: #{combined_loss.1} parent=0 // pred_region
    _
  $region25: #{combined_loss.1} parent=0 // pred_fallthru
    _

</llo_original>
